<compile_context>
chip_gen: v7x
topology: tpu7x:2x2x1
jax: 0.10.0
libtpu: 0.0.40
codegen_flags: <defaults>
</compile_context>

<pallas_src>
import jax
import jax.numpy as jnp
import numpy as np
from jax.experimental import pallas as pl
from jax.experimental.pallas import tpu as pltpu


def actor_kernel(x_ref, w1_ref, b1_ref, w2_ref, b2_ref, w3_ref, b3_ref, o_ref):
    # fc1 + ReLU: bf16 MXU operands (x narrowed in-kernel), f32 accumulation, f32 VPU math.
    x_bf = x_ref[...].astype(jnp.bfloat16)
    h1 = jnp.dot(x_bf, w1_ref[...], preferred_element_type=jnp.float32)
    h1 = jnp.maximum(h1 + b1_ref[...], 0.0)
    # fc2 + ReLU (re-narrow the activation only for the MXU operand).
    h2 = jnp.dot(h1.astype(jnp.bfloat16), w2_ref[...],
                 preferred_element_type=jnp.float32)
    h2 = jnp.maximum(h2 + b2_ref[...], 0.0)
    # fc3 + tanh (tanh on the EUP, in f32).
    h3 = jnp.dot(h2.astype(jnp.bfloat16), w3_ref[...],
                 preferred_element_type=jnp.float32)
    o_ref[...] = jnp.tanh(h3 + b3_ref[...]).astype(o_ref.dtype)


def prepare_actor_params(params):
    """One-time conversion of weights to bf16 (biases stay f32).

    Do this once when the parameters change, NOT inside the per-step forward, so no
    convert ops run per call under jit.
    """
    return dict(
        w1=params["w1"].astype(jnp.bfloat16), b1=params["b1"].astype(jnp.float32),
        w2=params["w2"].astype(jnp.bfloat16), b2=params["b2"].astype(jnp.float32),
        w3=params["w3"].astype(jnp.bfloat16), b3=params["b3"].astype(jnp.float32),
    )


def _round_up_8(n):
    return ((n + 7) // 8) * 8


def actor_forward(x, prepared, *, tb=4096):
    """x: (B, input_dim) float32.  prepared: output of prepare_actor_params().

    Returns (B, output_dim) float32 actions in (-1, 1).
    """
    w1, b1 = prepared["w1"], prepared["b1"]
    w2, b2 = prepared["w2"], prepared["b2"]
    w3, b3 = prepared["w3"], prepared["b3"]
    B, in_dim = x.shape
    out_dim = w3.shape[1]

    # Batch tile:
    #  * large default to amortize the ~0.35 us per-grid-step overhead,
    #  * capped so that for B >= 16 the grid has at least 2 steps (v7x megacore sharding),
    #  * rounded to a multiple of 8 sublanes when it is a proper sub-tile of the batch.
    tb = min(tb, B)
    if B >= 16:
        tb = min(tb, _round_up_8(pl.cdiv(B, 2)))
    if tb < B:
        tb = max(8, (tb // 8) * 8)
    grid = (pl.cdiv(B, tb),)

    # Weights/biases: same block every grid step -> DMA'd once, resident in VMEM.
    def resident(a):
        nd = a.ndim
        return pl.BlockSpec(a.shape, lambda i, _nd=nd: (0,) * _nd)

    return pl.pallas_call(
        actor_kernel,
        out_shape=jax.ShapeDtypeStruct((B, out_dim), jnp.float32),
        grid=grid,
        in_specs=[
            pl.BlockSpec((tb, in_dim), lambda i: (i, 0)),   # x: streamed per batch tile (f32)
            resident(w1), resident(b1),
            resident(w2), resident(b2),
            resident(w3), resident(b3),
        ],
        out_specs=pl.BlockSpec((tb, out_dim), lambda i: (i, 0)),
        compiler_params=pltpu.CompilerParams(
            dimension_semantics=("parallel",)),
    )(x, w1, b1, w2, b2, w3, b3)


def init_actor_params(key, input_dim, hidden_in_dim, hidden_out_dim, output_dim):
    """Deterministic init mirroring ActorNetwork.reset_parameters()."""
    k1, k2, k3, kb1, kb2, kb3 = jax.random.split(key, 6)

    # hidden_init uses weight.size()[0] == out_features as "fan_in" (faithful to the
    # original code's quirk), giving lim = 1/sqrt(out_features).
    lim1 = 1.0 / np.sqrt(hidden_in_dim)
    lim2 = 1.0 / np.sqrt(hidden_out_dim)
    lim3 = 1.0e-3

    # Weights stored as (in_features, out_features).
    w1 = jax.random.uniform(k1, (input_dim, hidden_in_dim), jnp.float32, -lim1, lim1)
    w2 = jax.random.uniform(k2, (hidden_in_dim, hidden_out_dim), jnp.float32, -lim2, lim2)
    w3 = jax.random.uniform(k3, (hidden_out_dim, output_dim), jnp.float32, -lim3, lim3)

    # PyTorch nn.Linear bias default init: uniform(-1/sqrt(fan_in), 1/sqrt(fan_in)).
    b1 = jax.random.uniform(kb1, (1, hidden_in_dim), jnp.float32,
                            -1.0 / np.sqrt(input_dim), 1.0 / np.sqrt(input_dim))
    b2 = jax.random.uniform(kb2, (1, hidden_out_dim), jnp.float32,
                            -1.0 / np.sqrt(hidden_in_dim), 1.0 / np.sqrt(hidden_in_dim))
    b3 = jax.random.uniform(kb3, (1, output_dim), jnp.float32,
                            -1.0 / np.sqrt(hidden_out_dim), 1.0 / np.sqrt(hidden_out_dim))

    return dict(w1=w1, b1=b1, w2=w2, b2=b2, w3=w3, b3=b3)


def actor_reference(x, p):
    h1 = jnp.maximum(x @ p["w1"] + p["b1"], 0.0)
    h2 = jnp.maximum(h1 @ p["w2"] + p["b2"], 0.0)
    return jnp.tanh(h2 @ p["w3"] + p["b3"])


if __name__ == "__main__":
    # Small shapes consistent with the module (e.g. Tennis actor: 24 -> 32 -> 32 -> 2).
    input_dim, hidden_in_dim, hidden_out_dim, output_dim = 24, 32, 32, 2

    key = jax.random.PRNGKey(0)
    kx, kp, kx2, kx3 = jax.random.split(key, 4)
    params = init_actor_params(kp, input_dim, hidden_in_dim, hidden_out_dim, output_dim)
    prepared = prepare_actor_params(params)   # one-time bf16 weight conversion

    # bf16 weights loosen tolerance vs. the pure-f32 reference (x now stays f32; pre-tanh
    # logits see ~1e-2 relative error through this tiny head).
    tol = dict(rtol=2e-2, atol=2e-2)

    # 1) Small batch (< 16): single full-batch block.
    x = jax.random.normal(kx, (8, input_dim), jnp.float32)
    out = jax.block_until_ready(actor_forward(x, prepared))
    np.testing.assert_allclose(np.asarray(out), np.asarray(actor_reference(x, params)), **tol)

    # 2) Multi-tile path with a partial trailing tile (exercises the pipelined grid).
    x2 = jax.random.normal(kx2, (40, input_dim), jnp.float32)
    out2 = jax.block_until_ready(actor_forward(x2, prepared, tb=16))
    np.testing.assert_allclose(np.asarray(out2), np.asarray(actor_reference(x2, params)), **tol)

    # 3) Default-tb path: B >= 16 so the tile is capped to give >= 2 grid steps
    #    (both v7x TensorCores get work via the "parallel" batch axis).
    x3 = jax.random.normal(kx3, (48, input_dim), jnp.float32)
    out3 = jax.block_until_ready(actor_forward(x3, prepared))
    np.testing.assert_allclose(np.asarray(out3), np.asarray(actor_reference(x3, params)), **tol)

    print("KERNEL_OK")
</pallas_src>

<mosaic_0001>
module attributes {stable_mosaic.version = 11 : i64} {
  func.func @actor_kernel(%arg0: i32, %arg1: memref<8x24xf32, #tpu.memory_space<vmem>>, %arg2: memref<24x32xbf16, #tpu.memory_space<vmem>>, %arg3: memref<1x32xf32, #tpu.memory_space<vmem>>, %arg4: memref<32x32xbf16, #tpu.memory_space<vmem>>, %arg5: memref<1x32xf32, #tpu.memory_space<vmem>>, %arg6: memref<32x2xbf16, #tpu.memory_space<vmem>>, %arg7: memref<1x2xf32, #tpu.memory_space<vmem>>, %arg8: memref<8x2xf32, #tpu.memory_space<vmem>>) attributes {dimension_semantics = [#tpu.dimension_semantics<parallel>], iteration_bounds = array<i64: 1>, scalar_prefetch = 0 : i64, scratch_operands = 0 : i64, tpu.core_type = #tpu.core_type<tc>, window_params = [{transform_indices = @transform_0, window_bounds = array<i64: 8, 24>}, {pipeline_mode = #tpu.pipeline_mode<synchronous>, transform_indices = @transform_1, window_bounds = array<i64: 24, 32>}, {pipeline_mode = #tpu.pipeline_mode<synchronous>, transform_indices = @transform_2, window_bounds = array<i64: 1, 32>}, {pipeline_mode = #tpu.pipeline_mode<synchronous>, transform_indices = @transform_3, window_bounds = array<i64: 32, 32>}, {pipeline_mode = #tpu.pipeline_mode<synchronous>, transform_indices = @transform_4, window_bounds = array<i64: 1, 32>}, {pipeline_mode = #tpu.pipeline_mode<synchronous>, transform_indices = @transform_5, window_bounds = array<i64: 32, 2>}, {pipeline_mode = #tpu.pipeline_mode<synchronous>, transform_indices = @transform_6, window_bounds = array<i64: 1, 2>}, {transform_indices = @transform_7, window_bounds = array<i64: 8, 2>}]} {
    %c0 = arith.constant 0 : index
    %c0_0 = arith.constant 0 : index
    %0 = vector.load %arg1[%c0, %c0_0] : memref<8x24xf32, #tpu.memory_space<vmem>>, vector<8x24xf32>
    %1 = arith.truncf %0 : vector<8x24xf32> to vector<8x24xbf16>
    %c0_1 = arith.constant 0 : index
    %c0_2 = arith.constant 0 : index
    %2 = vector.load %arg2[%c0_1, %c0_2] : memref<24x32xbf16, #tpu.memory_space<vmem>>, vector<24x32xbf16>
    %cst = arith.constant dense<0.000000e+00> : vector<8x32xf32>
    %3 = tpu.matmul %1, %2, %cst {dimension_numbers = #tpu.dot_dimension_numbers<[1], [0], [0], [1], [0, 0, 1, 1], [], []>} : vector<8x24xbf16>, vector<24x32xbf16>, vector<8x32xf32> -> vector<8x32xf32>
    %c0_3 = arith.constant 0 : index
    %c0_4 = arith.constant 0 : index
    %4 = vector.load %arg3[%c0_3, %c0_4] : memref<1x32xf32, #tpu.memory_space<vmem>>, vector<1x32xf32>
    %5 = vector.broadcast %4 : vector<1x32xf32> to vector<8x32xf32>
    %6 = arith.addf %3, %5 : vector<8x32xf32>
    %cst_5 = arith.constant 0.000000e+00 : f32
    %7 = vector.broadcast %cst_5 : f32 to vector<8x32xf32>
    %8 = arith.maximumf %6, %7 : vector<8x32xf32>
    %9 = arith.truncf %8 : vector<8x32xf32> to vector<8x32xbf16>
    %c0_6 = arith.constant 0 : index
    %c0_7 = arith.constant 0 : index
    %10 = vector.load %arg4[%c0_6, %c0_7] : memref<32x32xbf16, #tpu.memory_space<vmem>>, vector<32x32xbf16>
    %cst_8 = arith.constant dense<0.000000e+00> : vector<8x32xf32>
    %11 = tpu.matmul %9, %10, %cst_8 {dimension_numbers = #tpu.dot_dimension_numbers<[1], [0], [0], [1], [0, 0, 1, 1], [], []>} : vector<8x32xbf16>, vector<32x32xbf16>, vector<8x32xf32> -> vector<8x32xf32>
    %c0_9 = arith.constant 0 : index
    %c0_10 = arith.constant 0 : index
    %12 = vector.load %arg5[%c0_9, %c0_10] : memref<1x32xf32, #tpu.memory_space<vmem>>, vector<1x32xf32>
    %13 = vector.broadcast %12 : vector<1x32xf32> to vector<8x32xf32>
    %14 = arith.addf %11, %13 : vector<8x32xf32>
    %cst_11 = arith.constant 0.000000e+00 : f32
    %15 = vector.broadcast %cst_11 : f32 to vector<8x32xf32>
    %16 = arith.maximumf %14, %15 : vector<8x32xf32>
    %17 = arith.truncf %16 : vector<8x32xf32> to vector<8x32xbf16>
    %c0_12 = arith.constant 0 : index
    %c0_13 = arith.constant 0 : index
    %18 = vector.load %arg6[%c0_12, %c0_13] : memref<32x2xbf16, #tpu.memory_space<vmem>>, vector<32x2xbf16>
    %cst_14 = arith.constant dense<0.000000e+00> : vector<8x2xf32>
    %19 = tpu.matmul %17, %18, %cst_14 {dimension_numbers = #tpu.dot_dimension_numbers<[1], [0], [0], [1], [0, 0, 1, 1], [], []>} : vector<8x32xbf16>, vector<32x2xbf16>, vector<8x2xf32> -> vector<8x2xf32>
    %c0_15 = arith.constant 0 : index
    %c0_16 = arith.constant 0 : index
    %20 = vector.load %arg7[%c0_15, %c0_16] : memref<1x2xf32, #tpu.memory_space<vmem>>, vector<1x2xf32>
    %21 = vector.broadcast %20 : vector<1x2xf32> to vector<8x2xf32>
    %22 = arith.addf %19, %21 : vector<8x2xf32>
    %23 = math.tanh %22 : vector<8x2xf32>
    %c0_17 = arith.constant 0 : index
    %c0_18 = arith.constant 0 : index
    %24 = vector.load %arg8[%c0_17, %c0_18] : memref<8x2xf32, #tpu.memory_space<vmem>>, vector<8x2xf32>
    tpu.vector_store %arg8[%c0_17, %c0_18], %23 {strides = array<i32>} : memref<8x2xf32, #tpu.memory_space<vmem>>, vector<8x2xf32>,
    return
  }
  func.func @transform_0(%arg0: i32) -> (i32, i32) {
    %c0_i32 = arith.constant 0 : i32
    %c0_i32_0 = arith.constant 0 : i32
    return %arg0, %c0_i32 : i32, i32
  }
  func.func @transform_1(%arg0: i32) -> (i32, i32) {
    %c0_i32 = arith.constant 0 : i32
    %c0_i32_0 = arith.constant 0 : i32
    %c0_i32_1 = arith.constant 0 : i32
    return %c0_i32, %c0_i32_0 : i32, i32
  }
  func.func @transform_2(%arg0: i32) -> (i32, i32) {
    %c0_i32 = arith.constant 0 : i32
    %c0_i32_0 = arith.constant 0 : i32
    %c0_i32_1 = arith.constant 0 : i32
    return %c0_i32, %c0_i32_0 : i32, i32
  }
  func.func @transform_3(%arg0: i32) -> (i32, i32) {
    %c0_i32 = arith.constant 0 : i32
    %c0_i32_0 = arith.constant 0 : i32
    %c0_i32_1 = arith.constant 0 : i32
    return %c0_i32, %c0_i32_0 : i32, i32
  }
  func.func @transform_4(%arg0: i32) -> (i32, i32) {
    %c0_i32 = arith.constant 0 : i32
    %c0_i32_0 = arith.constant 0 : i32
    %c0_i32_1 = arith.constant 0 : i32
    return %c0_i32, %c0_i32_0 : i32, i32
  }
  func.func @transform_5(%arg0: i32) -> (i32, i32) {
    %c0_i32 = arith.constant 0 : i32
    %c0_i32_0 = arith.constant 0 : i32
    %c0_i32_1 = arith.constant 0 : i32
    return %c0_i32, %c0_i32_0 : i32, i32
  }
  func.func @transform_6(%arg0: i32) -> (i32, i32) {
    %c0_i32 = arith.constant 0 : i32
    %c0_i32_0 = arith.constant 0 : i32
    %c0_i32_1 = arith.constant 0 : i32
    return %c0_i32, %c0_i32_0 : i32, i32
  }
  func.func @transform_7(%arg0: i32) -> (i32, i32) {
    %c0_i32 = arith.constant 0 : i32
    %c0_i32_0 = arith.constant 0 : i32
    return %arg0, %c0_i32 : i32, i32
  }
}

</mosaic_0001>

<llo_original>
// kernel: tpu_custom_call.1
$region0: #{tpu_custom_call.1}
  #allocation0 [shape = 'u32[]', space=smem, size = 0x4, offset = 0x4, fixed_abs, tag = 'smem constant byte address 0x4 - core index']
  #allocation1 [shape = 'u32[144,128]{1,0:T(1,128)}', space=vmem, size = 0x12000, scoped, tag = 'internal scratch']
  %s0 = inlined_call_operand.hbm [shape: f32[8,24], index: 0, kind: input, shape index: {}]
  %s1 = inlined_call_operand.vmem [shape: bf16[24,32], index: 1, kind: input, shape index: {}]
  %s2 = inlined_call_operand.hbm [shape: f32[1,32], index: 2, kind: input, shape index: {}]
  %s3 = inlined_call_operand.vmem [shape: bf16[32,32], index: 3, kind: input, shape index: {}]
  %s4 = inlined_call_operand.vmem [shape: f32[1,32], index: 4, kind: input, shape index: {}]
  %s5 = inlined_call_operand.vmem [shape: bf16[32,2], index: 5, kind: input, shape index: {}]
  %s6 = inlined_call_operand.vmem [shape: f32[1,2], index: 6, kind: input, shape index: {}]
  %s7 = inlined_call_operand.vmem [shape: f32[8,2], index: 7, kind: output, shape index: {}]
  %s8 = sld [smem:[#allocation0]]
  $region46: #{tpu_custom_call.1} parent=0
    _
  %s10 = ssub.s32 1, %s8
  %s11 = scalar_select 0, %s10, %s8
  $region1: #{tpu_custom_call.1} parent=0
    #allocation2 [shape = 'u8[4096]{0}', space=vmem, size = 0x1000, scoped, tag = 'input window, operand 0, single buffered']
    #allocation3 [shape = 's32[1]{0}', space=sflag, size = 0x4, scoped, tag = 'scoped memory for tpu_custom_call.1']
    #allocation4 [shape = 'u8[512]{0}', space=vmem, size = 0x400, scoped, tag = 'input window, operand 2, single buffered']
    #allocation5 [shape = 's32[1]{0}', space=sflag, size = 0x4, scoped, tag = 'scoped memory for tpu_custom_call.1']
    %12 = vsyncpa [#allocation3], 0
    %13 = vsyncpa [#allocation5], 0
    // Predicated region
    $region2: #{tpu_custom_call.1} parent=1 // pred_check
      _
    $region3: #{tpu_custom_call.1} parent=1 // pred_check_branch
      %15 = sbr.rel (0) target = $region5
    $region4: #{tpu_custom_call.1} parent=1 // pred_region
      %s17 = ssub.s32 128, 128
      %18 = vsyncadd [#allocation3], %s17
      %s20 = sshll.u32 [#allocation2], 4
      %s21 = int_to_ptr.vmem [resolvable:$true] %s20
      %23 = dma.hbm_to_vmem [thread:$0]  %s0, 128, %s21, [#allocation3]
    $region5: #{tpu_custom_call.1} parent=1 // pred_fallthru
      _
    // Predicated region
    $region6: #{tpu_custom_call.1} parent=1 // pred_check
      _
    $region7: #{tpu_custom_call.1} parent=1 // pred_check_branch
      %25 = sbr.rel (0) target = $region9
    $region8: #{tpu_custom_call.1} parent=1 // pred_region
      _
    $region9: #{tpu_custom_call.1} parent=1 // pred_fallthru
      _
    // Predicated region
    $region10: #{tpu_custom_call.1} parent=1 // pred_check
      _
    $region11: #{tpu_custom_call.1} parent=1 // pred_check_branch
      %27 = sbr.rel (0) target = $region13
    $region12: #{tpu_custom_call.1} parent=1 // pred_region
      %s29 = ssub.s32 16, 16
      %30 = vsyncadd [#allocation5], %s29
      %s32 = sshll.u32 [#allocation4], 4
      %s33 = int_to_ptr.vmem [resolvable:$true] %s32
      %35 = dma.hbm_to_vmem [thread:$0]  %s2, 16, %s33, [#allocation5]
    $region13: #{tpu_custom_call.1} parent=1 // pred_fallthru
      _
    // Predicated region
    $region14: #{tpu_custom_call.1} parent=1 // pred_check
      _
    $region15: #{tpu_custom_call.1} parent=1 // pred_check_branch
      %37 = sbr.rel (0) target = $region17
    $region16: #{tpu_custom_call.1} parent=1 // pred_region
      _
    $region17: #{tpu_custom_call.1} parent=1 // pred_fallthru
      _
    // Predicated region
    $region18: #{tpu_custom_call.1} parent=1 // pred_check
      _
    $region19: #{tpu_custom_call.1} parent=1 // pred_check_branch
      %39 = sbr.rel (0) target = $region21
    $region20: #{tpu_custom_call.1} parent=1 // pred_region
      _
    $region21: #{tpu_custom_call.1} parent=1 // pred_fallthru
      _
    // Predicated region
    $region22: #{tpu_custom_call.1} parent=1 // pred_check
      _
    $region23: #{tpu_custom_call.1} parent=1 // pred_check_branch
      %41 = sbr.rel (0) target = $region25
    $region24: #{tpu_custom_call.1} parent=1 // pred_region
      _
    $region25: #{tpu_custom_call.1} parent=1 // pred_fallthru
      _
    // Predicated region
    $region26: #{tpu_custom_call.1} parent=1 // pred_check
      _
    $region27: #{tpu_custom_call.1} parent=1 // pred_check_branch
      %43 = sbr.rel (0) target = $region29
    $region28: #{tpu_custom_call.1} parent=1 // pred_region
      _
    $region29: #{tpu_custom_call.1} parent=1 // pred_fallthru
      _
    // Predicated region
    $region30: #{tpu_custom_call.1} parent=1 // pred_check
      _
    $region31: #{tpu_custom_call.1} parent=1 // pred_check_branch
      %45 = sbr.rel (0) target = $region33
    $region32: #{tpu_custom_call.1} parent=1 // pred_region
      %46 = dma.done [#allocation3], 128
    $region33: #{tpu_custom_call.1} parent=1 // pred_fallthru
      _
    // Predicated region
    $region34: #{tpu_custom_call.1} parent=1 // pred_check
      _
    $region35: #{tpu_custom_call.1} parent=1 // pred_check_branch
      %48 = sbr.rel (0) target = $region37
    $region36: #{tpu_custom_call.1} parent=1 // pred_region
      %49 = dma.done [#allocation5], 16
    $region37: #{tpu_custom_call.1} parent=1 // pred_fallthru
      _
    %v51 = vld [vmem:[#allocation2] sm:$0xff]
    %v52 = vpack.c.bf16 %v51, %v51
    %v53 = vld [vmem:[%s1] sm:$0xf]
    %v54 = vld [vmem:[%s1 + $0x4] sm:$0xf]
    %v55 = vld [vmem:[%s1 + $0x8] sm:$0xf]
    %v56 = vld [vmem:[#allocation4] sm:$0x1]
    %v58 = vlaneseq
    %v59 = vshrl.u32 %v58, 7
    %v60 = vsub.s32 0, %v59
    %v61 = vrot.slane %v56, %v60
    %v66 = vunpack.c.l.b16 %v53
    %v67 = vunpack.c.l.b16 %v54
    %v68 = vunpack.c.l.b16 %v55
    %v69 = vpack.c.b16 %v67, %v66
    %v70 = vpack.c.b16 %v68, %v68
    %vm72 = vcmask 195584
    %v74 = vsel %vm72, %v52, 0
    %vm76 = vcmask 1043456
    %v78 = vsel %vm76, %v70, 0
    %80 = vmatprep.subr.bf16.mxu0 0
    %81 = vmatpush1.bf16.msra.mxu0 %v69
    %82 = vmatprep.subr.bf16.mxu0 0
    %83 = vmatpush1.bf16.msra.mxu0 %v78
    %84 = vmatprep.subr.bf16.mxu0 0
    %85 = vmatpush1.bf16.msra.mxu0 0
    %86 = vmatprep.subr.bf16.mxu0 0
    %87 = vmatpush1.bf16.msra.mxu0 0
    %88 = vmatprep.subr.bf16.mxu0 0
    %89 = vmatpush1.bf16.msra.mxu0 0
    %90 = vmatprep.subr.bf16.mxu0 0
    %91 = vmatpush1.bf16.msra.mxu0 0
    %92 = vmatprep.subr.bf16.mxu0 0
    %93 = vmatpush1.bf16.msra.mxu0 0
    %94 = vmatprep.subr.bf16.mxu0 0
    %95 = vmatpush1.bf16.msra.mxu0 0
    %96 = vmatprep.subr.bf16.mxu0 0
    %97 = vmatpush1.bf16.msra.mxu0 0
    %98 = vmatprep.subr.bf16.mxu0 0
    %99 = vmatpush1.bf16.msra.mxu0 0
    %100 = vmatprep.subr.bf16.mxu0 0
    %101 = vmatpush1.bf16.msra.mxu0 0
    %102 = vmatprep.subr.bf16.mxu0 0
    %103 = vmatpush1.bf16.msra.mxu0 0
    %104 = vmatprep.subr.bf16.mxu0 0
    %105 = vmatpush1.bf16.msra.mxu0 0
    %106 = vmatprep.subr.bf16.mxu0 0
    %107 = vmatpush1.bf16.msra.mxu0 0
    %108 = vmatprep.subr.bf16.mxu0 0
    %109 = vmatpush1.bf16.msra.mxu0 0
    %110 = vmatprep.subr.bf16.mxu0 0
    %111 = vmatpush1.bf16.msra.mxu0 0
    %112 = vmatprep.mubr.bf16.mxu0 0
    %113 = vmatmul.mubr.bf16.gmra.mrb[0].mxu0 %v74
    %v114 = vpop.f32.mrb[0].mxu0
    %v115 = vadd.f32 %v61, %v114
    %v116 = vpop.f32.mrb[0].mxu0
    %v117 = vpop.f32.mrb[0].mxu0
    %v118 = vpop.f32.mrb[0].mxu0
    %119 = vdwg.mxu0
    %v120 = vmax.f32 %v115, 0.0
    %v121 = vpack.c.bf16 %v120, %v120
    %v122 = vld [vmem:[%s3] sm:$0xf]
    %v123 = vld [vmem:[%s3 + $0x4] sm:$0xf]
    %v124 = vld [vmem:[%s3 + $0x8] sm:$0xf]
    %v125 = vld [vmem:[%s3 + $0xc] sm:$0xf]
    %v126 = vld [vmem:[%s4] sm:$0x1]
    %v128 = vlaneseq
    %v129 = vshrl.u32 %v128, 7
    %v130 = vsub.s32 0, %v129
    %v131 = vrot.slane %v126, %v130
    %v137 = vunpack.c.l.b16 %v122
    %v138 = vunpack.c.l.b16 %v123
    %v139 = vunpack.c.l.b16 %v124
    %v140 = vunpack.c.l.b16 %v125
    %v141 = vpack.c.b16 %v138, %v137
    %v142 = vpack.c.b16 %v140, %v139
    %vm145 = vcmask 261120
    %v147 = vsel %vm145, %v121, 0
    %149 = vmatprep.subr.bf16.mxu0 0
    %150 = vmatpush1.bf16.msra.mxu0 %v141
    %151 = vmatprep.subr.bf16.mxu0 0
    %152 = vmatpush1.bf16.msra.mxu0 %v142
    %153 = vmatprep.subr.bf16.mxu0 0
    %154 = vmatpush1.bf16.msra.mxu0 0
    %155 = vmatprep.subr.bf16.mxu0 0
    %156 = vmatpush1.bf16.msra.mxu0 0
    %157 = vmatprep.subr.bf16.mxu0 0
    %158 = vmatpush1.bf16.msra.mxu0 0
    %159 = vmatprep.subr.bf16.mxu0 0
    %160 = vmatpush1.bf16.msra.mxu0 0
    %161 = vmatprep.subr.bf16.mxu0 0
    %162 = vmatpush1.bf16.msra.mxu0 0
    %163 = vmatprep.subr.bf16.mxu0 0
    %164 = vmatpush1.bf16.msra.mxu0 0
    %165 = vmatprep.subr.bf16.mxu0 0
    %166 = vmatpush1.bf16.msra.mxu0 0
    %167 = vmatprep.subr.bf16.mxu0 0
    %168 = vmatpush1.bf16.msra.mxu0 0
    %169 = vmatprep.subr.bf16.mxu0 0
    %170 = vmatpush1.bf16.msra.mxu0 0
    %171 = vmatprep.subr.bf16.mxu0 0
    %172 = vmatpush1.bf16.msra.mxu0 0
    %173 = vmatprep.subr.bf16.mxu0 0
    %174 = vmatpush1.bf16.msra.mxu0 0
    %175 = vmatprep.subr.bf16.mxu0 0
    %176 = vmatpush1.bf16.msra.mxu0 0
    %177 = vmatprep.subr.bf16.mxu0 0
    %178 = vmatpush1.bf16.msra.mxu0 0
    %179 = vmatprep.subr.bf16.mxu0 0
    %180 = vmatpush1.bf16.msra.mxu0 0
    %181 = vmatprep.mubr.bf16.mxu0 0
    %182 = vmatmul.mubr.bf16.gmra.mrb[0].mxu0 %v147
    %v183 = vpop.f32.mrb[0].mxu0
    %v184 = vadd.f32 %v131, %v183
    %v185 = vpop.f32.mrb[0].mxu0
    %v186 = vpop.f32.mrb[0].mxu0
    %v187 = vpop.f32.mrb[0].mxu0
    %188 = vdwg.mxu0
    %v189 = vmax.f32 %v184, 0.0
    %v190 = vpack.c.bf16 %v189, %v189
    %v191 = vld [vmem:[%s5] sm:$0xf]
    %v192 = vld [vmem:[%s5 + $0x4] sm:$0xf]
    %v193 = vld [vmem:[%s5 + $0x8] sm:$0xf]
    %v194 = vld [vmem:[%s5 + $0xc] sm:$0xf]
    %v195 = vld [vmem:[%s6] sm:$0x1]
    %v197 = vlaneseq
    %v198 = vshrl.u32 %v197, 7
    %v199 = vsub.s32 0, %v198
    %v200 = vrot.slane %v195, %v199
    %v206 = vunpack.c.l.b16 %v191
    %v207 = vunpack.c.l.b16 %v192
    %v208 = vunpack.c.l.b16 %v193
    %v209 = vunpack.c.l.b16 %v194
    %v210 = vpack.c.b16 %v207, %v206
    %v211 = vpack.c.b16 %v209, %v208
    %v215 = vsel %vm145, %v190, 0
    %217 = vmatprep.subr.bf16.mxu0 0
    %218 = vmatpush1.bf16.msra.mxu0 %v210
    %219 = vmatprep.subr.bf16.mxu0 0
    %220 = vmatpush1.bf16.msra.mxu0 %v211
    %221 = vmatprep.subr.bf16.mxu0 0
    %222 = vmatpush1.bf16.msra.mxu0 0
    %223 = vmatprep.subr.bf16.mxu0 0
    %224 = vmatpush1.bf16.msra.mxu0 0
    %225 = vmatprep.subr.bf16.mxu0 0
    %226 = vmatpush1.bf16.msra.mxu0 0
    %227 = vmatprep.subr.bf16.mxu0 0
    %228 = vmatpush1.bf16.msra.mxu0 0
    %229 = vmatprep.subr.bf16.mxu0 0
    %230 = vmatpush1.bf16.msra.mxu0 0
    %231 = vmatprep.subr.bf16.mxu0 0
    %232 = vmatpush1.bf16.msra.mxu0 0
    %233 = vmatprep.subr.bf16.mxu0 0
    %234 = vmatpush1.bf16.msra.mxu0 0
    %235 = vmatprep.subr.bf16.mxu0 0
    %236 = vmatpush1.bf16.msra.mxu0 0
    %237 = vmatprep.subr.bf16.mxu0 0
    %238 = vmatpush1.bf16.msra.mxu0 0
    %239 = vmatprep.subr.bf16.mxu0 0
    %240 = vmatpush1.bf16.msra.mxu0 0
    %241 = vmatprep.subr.bf16.mxu0 0
    %242 = vmatpush1.bf16.msra.mxu0 0
    %243 = vmatprep.subr.bf16.mxu0 0
    %244 = vmatpush1.bf16.msra.mxu0 0
    %245 = vmatprep.subr.bf16.mxu0 0
    %246 = vmatpush1.bf16.msra.mxu0 0
    %247 = vmatprep.subr.bf16.mxu0 0
    %248 = vmatpush1.bf16.msra.mxu0 0
    %249 = vmatprep.mubr.bf16.mxu0 0
    %250 = vmatmul.mubr.bf16.gmra.mrb[0].mxu0 %v215
    %v251 = vpop.f32.mrb[0].mxu0
    %v252 = vadd.f32 %v200, %v251
    %v253 = vpop.f32.mrb[0].mxu0
    %v254 = vpop.f32.mrb[0].mxu0
    %v255 = vpop.f32.mrb[0].mxu0
    %256 = vdwg.mxu0
    %v257 = vtanh.pop %v252
    %vm258 = vcmask 15360
    %259 = vst.msk [vmem:[%s7] sm:$0xff] %vm258, %v257
    // Predicated region
    $region38: #{tpu_custom_call.1} parent=1 // pred_check
      _
    $region39: #{tpu_custom_call.1} parent=1 // pred_check_branch
      %261 = sbr.rel (0) target = $region41
    $region40: #{tpu_custom_call.1} parent=1 // pred_region
      _
    $region41: #{tpu_custom_call.1} parent=1 // pred_fallthru
      _
    // Predicated region
    $region42: #{tpu_custom_call.1} parent=1 // pred_check
      _
    $region43: #{tpu_custom_call.1} parent=1 // pred_check_branch
      %263 = sbr.rel (0) target = $region45
    $region44: #{tpu_custom_call.1} parent=1 // pred_region
      _
    $region45: #{tpu_custom_call.1} parent=1 // pred_fallthru
      _
    %264 = vsyncpa [#allocation3], 1
    %265 = vsyncpa [#allocation5], 1

</llo_original>
